<compile_context>
chip_gen: v7x
topology: tpu7x:2x2x1
jax: 0.10.0
libtpu: 0.0.40
codegen_flags: <defaults>
</compile_context>

<pallas_src>
import functools

import jax
import jax.numpy as jnp
from jax import lax
from jax.experimental import pallas as pl
from jax.experimental.pallas import tpu as pltpu

_NEG = -1e30  # finite "-inf" used for masking (avoids inf-inf NaNs)


def _round_up(x, m):
    return (x + m - 1) // m * m


def _vmem_limit_bytes():
    # Per-generation VMEM budget: 75% of physical capacity (v5e/v6e: 128 MiB,
    # v7x: 64 MiB).  Falls back to a conservative 48 MiB if the query fails.
    try:
        cap = int(pltpu.get_tpu_info().vmem_capacity_bytes)
    except Exception:
        cap = 64 * 1024 * 1024
    return int(cap * 3 // 4)


# --------------------------------------------------------------------------
# Kernel 1: CLIP contrastive loss, tiled over row blocks of the logits.
#   logits_per_image = scale * img @ txt.T ;  logits_per_text = logits.T
#   loss = (CE(logits_per_image, arange) + CE(logits_per_text, arange)) / 2
# --------------------------------------------------------------------------
def clip_loss_kernel(scale_ref, nvalid_ref, img_ref, txt_ref,
                     loss_ref, logits_ref,
                     col_m, col_s, acc_row, acc_diag, *, padded):
    i = pl.program_id(0)
    tm = img_ref.shape[0]
    n_pad = txt_ref.shape[0]
    n = nvalid_ref[0]

    @pl.when(i == 0)
    def _init():
        col_m[...] = jnp.full_like(col_m, _NEG)
        col_s[...] = jnp.zeros_like(col_s)
        acc_row[...] = jnp.zeros_like(acc_row)
        acc_diag[...] = jnp.zeros_like(acc_diag)
        loss_ref[...] = jnp.zeros_like(loss_ref)

    # Fold logit_scale into the (tm, D) image block (cheap) instead of scaling
    # the (tm, n_pad) logits slab.  Keep the feature dtype so bf16 callers get
    # a bf16 MXU pass (f32 accumulation via preferred_element_type).
    scale = scale_ref[0].astype(img_ref.dtype)
    img_s = img_ref[...] * scale                                    # (tm, D)
    row0 = pl.multiple_of(i * tm, tm)
    txt_blk = txt_ref[pl.ds(row0, tm), :]                           # (tm, D)

    # Row slab of logits on the MXU.
    logits = lax.dot_general(img_s, txt_ref[...], (((1,), (1,)), ((), ())),
                             preferred_element_type=jnp.float32)    # (tm, n_pad)
    logits_ref[...] = logits.astype(logits_ref.dtype)

    # Diagonal logits (labels == arange) straight from the features: O(tm*D).
    diag = jnp.sum(img_s.astype(jnp.float32) * txt_blk.astype(jnp.float32),
                   axis=1, keepdims=True)                           # (tm, 1)

    if padded:
        # Validity masks: only compiled in when n < n_pad.
        col_ids = lax.broadcasted_iota(jnp.int32, (tm, n_pad), 1)
        row_ids = row0 + lax.broadcasted_iota(jnp.int32, (tm, 1), 0)
        row_ok = row_ids < n                                        # (tm, 1)
        valid = jnp.logical_and(col_ids < n, row_ok)                # (tm, n_pad)
        masked = jnp.where(valid, logits, _NEG)
        rowf = row_ok.astype(jnp.float32)
    else:
        masked = logits

    # image->text CE: per-row logsumexp (rows are complete within this block).
    row_m = jnp.max(masked, axis=1, keepdims=True)                  # (tm, 1)
    row_s = jnp.sum(jnp.exp(masked - row_m), axis=1, keepdims=True)
    row_lse = row_m + jnp.log(row_s)                                # (tm, 1)
    if padded:
        acc_row[...] += jnp.sum((row_lse - diag) * rowf, keepdims=True)
        acc_diag[...] += jnp.sum(diag * rowf, keepdims=True)
    else:
        acc_row[...] += jnp.sum(row_lse - diag, keepdims=True)
        acc_diag[...] += jnp.sum(diag, keepdims=True)

    # text->image CE: streaming (online) column logsumexp across row blocks.
    # TODO(synk): a single-exp variant (constant shift = logit_scale) would save
    #             one (tm, n_pad) EUP pass per step but can underflow an entire
    #             column to -inf at large scales; kept the exact online-max path
    #             per the review's own correctness concern.
    blk_m = jnp.max(masked, axis=0, keepdims=True)                  # (1, n_pad)
    new_m = jnp.maximum(col_m[...], blk_m)
    col_s[...] = (col_s[...] * jnp.exp(col_m[...] - new_m)
                  + jnp.sum(jnp.exp(masked - new_m), axis=0, keepdims=True))
    col_m[...] = new_m

    @pl.when(i == pl.num_programs(0) - 1)
    def _finalize():
        col_lse = col_m[...] + jnp.log(col_s[...])                  # (1, n_pad)
        if padded:
            cvalid = lax.broadcasted_iota(jnp.int32, (1, n_pad), 1) < n
            col_sum = jnp.sum(jnp.where(cvalid, col_lse, 0.0), keepdims=True)
        else:
            col_sum = jnp.sum(col_lse, keepdims=True)
        nf = n.astype(jnp.float32)
        loss_i = acc_row[...] / nf
        loss_t = (col_sum - acc_diag[...]) / nf
        loss_ref[...] = 0.5 * (loss_i + loss_t)


def pallas_clip_loss(image_features, text_features, logit_scale, *, block_rows=256):
    n, d = image_features.shape
    n_pad128 = _round_up(n, 128)            # lane-dense logits width
    tm = min(block_rows, n_pad128)
    if tm >= 128:
        tm = (tm // 128) * 128              # 128-aligned row blocks (MXU / stores)
    else:
        tm = max(8, 1 << (tm.bit_length() - 1))   # small power of two (divides 128)
    n_pad = _round_up(n_pad128, tm)         # multiple of both 128 and tm
    padded = (n_pad != n)

    img = image_features                    # keep caller dtype (bf16 stays bf16)
    txt = text_features
    if padded:
        img = jnp.pad(img, ((0, n_pad - n), (0, 0)))
        txt = jnp.pad(txt, ((0, n_pad - n), (0, 0)))
    scale = jnp.reshape(jnp.asarray(logit_scale, jnp.float32), (1,))
    nvalid = jnp.full((1,), n, jnp.int32)
    logits_dtype = image_features.dtype     # bf16 in -> bf16 logits writeback

    kernel = functools.partial(clip_loss_kernel, padded=padded)
    loss, logits = pl.pallas_call(
        kernel,
        out_shape=(jax.ShapeDtypeStruct((1, 1), jnp.float32),
                   jax.ShapeDtypeStruct((n_pad, n_pad), logits_dtype)),
        grid=(n_pad // tm,),
        in_specs=[pl.BlockSpec(memory_space=pltpu.MemorySpace.SMEM),  # logit scale
                  pl.BlockSpec(memory_space=pltpu.MemorySpace.SMEM),  # valid row count
                  pl.BlockSpec((tm, d), lambda i: (i, 0)),            # image row block
                  # Resident text panel (constant index map -> DMA'd once).
                  # TODO(synk): pipeline_mode=pl.Buffered(1) here would drop the
                  #             second buffer for very large batches on v7x.
                  pl.BlockSpec((n_pad, d), lambda i: (0, 0))],
        out_specs=(pl.BlockSpec((1, 1), lambda i: (0, 0)),
                   pl.BlockSpec((tm, n_pad), lambda i: (i, 0))),
        scratch_shapes=[pltpu.VMEM((1, n_pad), jnp.float32),   # streaming column max
                        pltpu.VMEM((1, n_pad), jnp.float32),   # streaming column sum
                        pltpu.VMEM((1, 1), jnp.float32),       # sum(lse_row - diag)
                        pltpu.VMEM((1, 1), jnp.float32)],      # sum(diag)
        compiler_params=pltpu.CompilerParams(
            # Row-block axis carries the streaming column stats -> sequential.
            # TODO(synk): v7x dual-TC: split columns into two halves on a leading
            #             "parallel" axis with per-core col stats + tiny epilogue.
            dimension_semantics=("arbitrary",),
            vmem_limit_bytes=_vmem_limit_bytes()),
    )(scale, nvalid, img, txt)
    return loss[0, 0], logits[:n, :n]


# --------------------------------------------------------------------------
# Kernel 2: pairwise Euclidean distance on the MXU:
#   d(i, j) = sqrt(max(||a_i||^2 + ||b_j||^2 - 2 <a_i, b_j>, 0))
# Squared norms are precomputed in the wrapper and streamed as side inputs.
# TODO(synk): torch's 'donot_use_mm_for_euclid_dist' exact accumulation is
#             approximated by the matmul identity (clamped at 0); the deviation
#             is at fp rounding level and only visible for near-zero distances.
# TODO(synk): cdist(x, x) is symmetric; an in-kernel dual-tile (i,j)/(j,i) DMA
#             writeback would halve MXU flops (wrapper-level mirroring was
#             rejected: it costs more HBM traffic than the flops it saves).
# --------------------------------------------------------------------------
def cdist_mm_kernel(a_ref, b_ref, a_sq_ref, b_sq_ref, o_ref):
    ab = lax.dot_general(a_ref[...], b_ref[...], (((1,), (1,)), ((), ())),
                         preferred_element_type=jnp.float32)        # (tm, tr)
    d2 = (a_sq_ref[...] - 2.0 * ab) + b_sq_ref[...]                 # (tm,1)+(1,tr) bcast
    o_ref[...] = jnp.sqrt(jnp.maximum(d2, 0.0))


def pallas_cdist(a, b, *, block_m=256, block_r=256):
    m, d = a.shape
    r = b.shape[0]
    tm = min(block_m, _round_up(m, 8))
    tr = min(block_r, _round_up(r, 128))     # lane-dense output tiles
    m_pad = _round_up(m, tm)
    r_pad = _round_up(r, tr)
    a_p = a                                   # keep caller dtype across the boundary
    b_p = b
    if m_pad != m:
        a_p = jnp.pad(a_p, ((0, m_pad - m), (0, 0)))
    if r_pad != r:
        b_p = jnp.pad(b_p, ((0, r_pad - r), (0, 0)))
    # Squared norms computed once (plain XLA), streamed as (tm,1)/(1,tr) blocks.
    a_sq = jnp.sum(jnp.square(a_p.astype(jnp.float32)), axis=1, keepdims=True)  # (m_pad,1)
    b_sq = jnp.sum(jnp.square(b_p.astype(jnp.float32)), axis=1)[None, :]        # (1,r_pad)

    out = pl.pallas_call(
        cdist_mm_kernel,
        out_shape=jax.ShapeDtypeStruct((m_pad, r_pad), jnp.float32),
        grid=(m_pad // tm, r_pad // tr),
        in_specs=[pl.BlockSpec((tm, d), lambda i, j: (i, 0)),
                  pl.BlockSpec((tr, d), lambda i, j: (j, 0)),
                  pl.BlockSpec((tm, 1), lambda i, j: (i, 0)),
                  pl.BlockSpec((1, tr), lambda i, j: (0, j))],
        out_specs=pl.BlockSpec((tm, tr), lambda i, j: (i, j)),
        compiler_params=pltpu.CompilerParams(
            dimension_semantics=("parallel", "parallel"),
            vmem_limit_bytes=_vmem_limit_bytes()),
    )(a_p, b_p, a_sq, b_sq)
    return out[:m, :r]


# --------------------------------------------------------------------------
# Glue reproducing get_pair_wise_distance / adaptive score / forward()
# --------------------------------------------------------------------------
def _remove_self_column(dists, offset=0):
    """Drops element (i, offset + i) from each row i; mirrors the bool-mask + view."""
    b, r = dists.shape
    sel = jnp.arange(r - 1)[None, :]
    rows = jnp.arange(b)[:, None] + offset
    sel = jnp.where(sel < rows, sel, sel + 1)
    return jnp.take_along_axis(dists, sel, axis=1)


def adaptive_clip_forward(image_features, text_features, logit_scale,
                          idxs, poison_idxs, k=16):
    n = image_features.shape[0]

    # --- forward_sim_loss (Pallas kernel) ---
    loss, logits = pallas_clip_loss(image_features, text_features, logit_scale)
    labels = jnp.arange(n, dtype=jnp.int32)

    # --- single-device gather_features is the identity ---
    full_img, full_txt = image_features, text_features

    # --- adaptive branch: ONE cdist kernel call; d_v/d_t are slices ---
    full_ref = jnp.concatenate([full_img, full_txt], axis=0)         # (2n, D)
    full_d = pallas_cdist(full_ref, full_ref)                        # (2n, 2n)

    d_v = _remove_self_column(full_d[:n, :n])                        # (n, n-1)
    d_t = _remove_self_column(full_d[:n, n:2 * n])                   # (n, n-1)
    d = jnp.concatenate([d_v, d_t], axis=1)                          # (n, 2(n-1))

    a = jnp.sort(d, axis=1)
    idx_sorted = jnp.argsort(d, axis=1)
    a_full_d = jnp.sort(full_d, axis=1)

    idx_k = idx_sorted[:, :k]                                        # (n, k)
    # Matches the PyTorch reference exactly: idx values (indices into the
    # self-removed concatenated matrix) are used *raw* as row indices of
    # a_full_d, as torch.index_select(a_full_d, 0, row)[:, k] does.
    d_k = jnp.take(a_full_d[:, k], idx_k, axis=0)                    # (n, k)
    scores = (a[:, k][:, None] / d_k).mean(axis=1)                   # (n,)

    # poison bookkeeping is host metadata (kept off the device hot path,
    # no float()/.item() syncs)
    poison_set = set(poison_idxs)
    pmask_host = [1.0 if v in poison_set else 0.0 for v in idxs]
    enable_adaptive = any(m > 0.0 for m in pmask_host)
    if enable_adaptive:
        pmask = jnp.asarray(pmask_host, jnp.float32)
        adaptive_loss = jnp.sum(scores * pmask) / jnp.sum(pmask)
        loss = loss + adaptive_loss
    else:
        adaptive_loss = jnp.float32(0.0)

    # TODO(synk): lid_mle (track_lid, k=32/512) is an external function not
    #             provided with the module; LID outputs are omitted.
    # TODO(synk): original returns loss.item() for 'main_loss'; kept on-device
    #             here to avoid a host sync per step.
    return {
        "loss": loss,
        "logits": logits,
        "labels": labels,
        "main_loss": loss,
        "logits_scale": jnp.asarray(logit_scale, jnp.float32),
        "adaptive_loss": adaptive_loss,
        "scores": scores,
    }


# --------------------------------------------------------------------------
# Pure-JAX references for sanity checking the kernels.
# --------------------------------------------------------------------------
def _ref_clip_loss(img, txt, scale):
    logits = scale * img @ txt.T
    n = img.shape[0]
    diag = logits[jnp.arange(n), jnp.arange(n)]
    ce_i = jnp.mean(jax.nn.logsumexp(logits, axis=1) - diag)
    ce_t = jnp.mean(jax.nn.logsumexp(logits, axis=0) - diag)
    return 0.5 * (ce_i + ce_t), logits


def _ref_cdist(a, b):
    return jnp.sqrt(jnp.sum((a[:, None, :] - b[None, :, :]) ** 2, axis=-1))


if __name__ == "__main__":
    key = jax.random.PRNGKey(0)
    k_img, k_txt = jax.random.split(key)

    batch, dim = 16, 32                      # batch must exceed k=16 semantics
    image_features = jax.random.normal(k_img, (batch, dim), jnp.float32)
    text_features = jax.random.normal(k_txt, (batch, dim), jnp.float32)
    image_features = image_features / jnp.linalg.norm(image_features, axis=-1, keepdims=True)
    text_features = text_features / jnp.linalg.norm(text_features, axis=-1, keepdims=True)
    logit_scale = jnp.float32(14.285714)     # ~ exp(log(1/0.07))

    idxs = list(range(batch))
    poison_idxs = [1, 5, 11]

    results = adaptive_clip_forward(image_features, text_features, logit_scale,
                                    idxs, poison_idxs, k=16)
    jax.block_until_ready(results["loss"])
    jax.block_until_ready(results["logits"])

    # --- sanity checks against pure-JAX references ---
    ref_loss, ref_logits = _ref_clip_loss(image_features, text_features, logit_scale)

    # single row-block (padded to 128 lanes) path
    loss1, logits1 = pallas_clip_loss(image_features, text_features, logit_scale)
    assert jnp.allclose(logits1, ref_logits, atol=1e-4, rtol=1e-4)
    assert jnp.allclose(loss1, ref_loss, atol=1e-4, rtol=1e-4)

    # multi-row-block streaming + masked path (n=16, tm=8)
    loss2, logits2 = pallas_clip_loss(image_features, text_features, logit_scale,
                                      block_rows=8)
    assert jnp.allclose(logits2, ref_logits, atol=1e-4, rtol=1e-4)
    assert jnp.allclose(loss2, ref_loss, atol=1e-4, rtol=1e-4)

    # odd batch (padded / masked, streaming)
    n_odd = 13
    loss3, logits3 = pallas_clip_loss(image_features[:n_odd], text_features[:n_odd],
                                      logit_scale, block_rows=8)
    ref_loss3, ref_logits3 = _ref_clip_loss(image_features[:n_odd],
                                            text_features[:n_odd], logit_scale)
    assert jnp.allclose(logits3, ref_logits3, atol=1e-4, rtol=1e-4)
    assert jnp.allclose(loss3, ref_loss3, atol=1e-4, rtol=1e-4)

    # unpadded multi-block path (mask-free static specialization, streaming cols)
    kb_i, kb_t = jax.random.split(jax.random.PRNGKey(1))
    n_big = 256
    big_img = jax.random.normal(kb_i, (n_big, dim), jnp.float32)
    big_txt = jax.random.normal(kb_t, (n_big, dim), jnp.float32)
    big_img = big_img / jnp.linalg.norm(big_img, axis=-1, keepdims=True)
    big_txt = big_txt / jnp.linalg.norm(big_txt, axis=-1, keepdims=True)
    loss4, logits4 = pallas_clip_loss(big_img, big_txt, logit_scale, block_rows=128)
    ref_loss4, ref_logits4 = _ref_clip_loss(big_img, big_txt, logit_scale)
    assert jnp.allclose(logits4, ref_logits4, atol=1e-4, rtol=1e-4)
    assert jnp.allclose(loss4, ref_loss4, atol=1e-4, rtol=1e-4)

    # bf16 feature path: bf16 MXU pass + bf16 logits writeback
    loss_bf, logits_bf = pallas_clip_loss(image_features.astype(jnp.bfloat16),
                                          text_features.astype(jnp.bfloat16),
                                          logit_scale)
    assert logits_bf.dtype == jnp.bfloat16
    assert bool(jnp.isfinite(loss_bf))
    assert float(jnp.abs(loss_bf.astype(jnp.float32) - ref_loss)) < 0.25

    # MXU-identity cdist vs exact reference
    assert jnp.allclose(pallas_cdist(image_features, text_features),
                        _ref_cdist(image_features, text_features),
                        atol=1e-4, rtol=1e-4)

    print("KERNEL_OK")
</pallas_src>

<mosaic_0001>
module attributes {stable_mosaic.version = 11 : i64} {
  func.func @clip_loss_kernel(%arg0: i32, %arg1: memref<1xf32, #tpu.memory_space<smem>>, %arg2: memref<1xi32, #tpu.memory_space<smem>>, %arg3: memref<128x32xf32, #tpu.memory_space<vmem>>, %arg4: memref<128x32xf32, #tpu.memory_space<vmem>>, %arg5: memref<1x1xf32, #tpu.memory_space<vmem>>, %arg6: memref<128x128xf32, #tpu.memory_space<vmem>>, %arg7: memref<1x128xf32, #tpu.memory_space<vmem>>, %arg8: memref<1x128xf32, #tpu.memory_space<vmem>>, %arg9: memref<1x1xf32, #tpu.memory_space<vmem>>, %arg10: memref<1x1xf32, #tpu.memory_space<vmem>>) attributes {dimension_semantics = [#tpu.dimension_semantics<arbitrary>], iteration_bounds = array<i64: 1>, scalar_prefetch = 0 : i64, scratch_operands = 4 : i64, tpu.core_type = #tpu.core_type<tc>, window_params = [{transform_indices = @transform_0, window_bounds = array<i64: 1>}, {transform_indices = @transform_1, window_bounds = array<i64: 1>}, {transform_indices = @transform_2, window_bounds = array<i64: 128, 32>}, {pipeline_mode = #tpu.pipeline_mode<synchronous>, transform_indices = @transform_3, window_bounds = array<i64: 128, 32>}, {pipeline_mode = #tpu.pipeline_mode<synchronous>, transform_indices = @transform_4, window_bounds = array<i64: 1, 1>}, {transform_indices = @transform_5, window_bounds = array<i64: 128, 128>}]} {
    %c0 = arith.constant 0 : index
    %0 = memref.load %arg2[%c0] : memref<1xi32, #tpu.memory_space<smem>>
    %c0_i32 = arith.constant 0 : i32
    %1 = arith.cmpi eq, %arg0, %c0_i32 : i32
    %2 = arith.extui %1 : i1 to i32
    %c0_i32_0 = arith.constant 0 : i32
    %3 = arith.cmpi ne, %2, %c0_i32_0 : i32
    scf.if %3 {
      %cst_37 = arith.constant -1.000000e+30 : f32
      %80 = vector.broadcast %cst_37 : f32 to vector<1x128xf32>
      %c0_38 = arith.constant 0 : index
      %c0_39 = arith.constant 0 : index
      %81 = vector.load %arg7[%c0_38, %c0_39] : memref<1x128xf32, #tpu.memory_space<vmem>>, vector<1x128xf32>
      tpu.vector_store %arg7[%c0_38, %c0_39], %80 {strides = array<i32>} : memref<1x128xf32, #tpu.memory_space<vmem>>, vector<1x128xf32>,
      %cst_40 = arith.constant 0.000000e+00 : f32
      %82 = vector.broadcast %cst_40 : f32 to vector<1x128xf32>
      %c0_41 = arith.constant 0 : index
      %c0_42 = arith.constant 0 : index
      %83 = vector.load %arg8[%c0_41, %c0_42] : memref<1x128xf32, #tpu.memory_space<vmem>>, vector<1x128xf32>
      tpu.vector_store %arg8[%c0_41, %c0_42], %82 {strides = array<i32>} : memref<1x128xf32, #tpu.memory_space<vmem>>, vector<1x128xf32>,
      %cst_43 = arith.constant 0.000000e+00 : f32
      %84 = vector.broadcast %cst_43 : f32 to vector<1x1xf32>
      %c0_44 = arith.constant 0 : index
      %c0_45 = arith.constant 0 : index
      %85 = vector.load %arg9[%c0_44, %c0_45] : memref<1x1xf32, #tpu.memory_space<vmem>>, vector<1x1xf32>
      tpu.vector_store %arg9[%c0_44, %c0_45], %84 {strides = array<i32>} : memref<1x1xf32, #tpu.memory_space<vmem>>, vector<1x1xf32>,
      %cst_46 = arith.constant 0.000000e+00 : f32
      %86 = vector.broadcast %cst_46 : f32 to vector<1x1xf32>
      %c0_47 = arith.constant 0 : index
      %c0_48 = arith.constant 0 : index
      %87 = vector.load %arg10[%c0_47, %c0_48] : memref<1x1xf32, #tpu.memory_space<vmem>>, vector<1x1xf32>
      tpu.vector_store %arg10[%c0_47, %c0_48], %86 {strides = array<i32>} : memref<1x1xf32, #tpu.memory_space<vmem>>, vector<1x1xf32>,
      %cst_49 = arith.constant 0.000000e+00 : f32
      %88 = vector.broadcast %cst_49 : f32 to vector<1x1xf32>
      %c0_50 = arith.constant 0 : index
      %c0_51 = arith.constant 0 : index
      %89 = vector.load %arg5[%c0_50, %c0_51] : memref<1x1xf32, #tpu.memory_space<vmem>>, vector<1x1xf32>
      tpu.vector_store %arg5[%c0_50, %c0_51], %88 {strides = array<i32>} : memref<1x1xf32, #tpu.memory_space<vmem>>, vector<1x1xf32>,
    } else {
    }
    %c0_1 = arith.constant 0 : index
    %4 = memref.load %arg1[%c0_1] : memref<1xf32, #tpu.memory_space<smem>>
    %c0_2 = arith.constant 0 : index
    %c0_3 = arith.constant 0 : index
    %5 = vector.load %arg3[%c0_2, %c0_3] : memref<128x32xf32, #tpu.memory_space<vmem>>, vector<128x32xf32>
    %6 = vector.broadcast %4 : f32 to vector<128x32xf32>
    %7 = arith.mulf %5, %6 : vector<128x32xf32>
    %c128_i32 = arith.constant 128 : i32
    %8 = arith.muli %arg0, %c128_i32 : i32
    %9 = tpu.assume_multiple %8, 128 : i32
    %10 = arith.index_cast %9 : i32 to index
    %c0_4 = arith.constant 0 : index
    %11 = vector.load %arg4[%10, %c0_4] : memref<128x32xf32, #tpu.memory_space<vmem>>, vector<128x32xf32>
    %c0_5 = arith.constant 0 : index
    %c0_6 = arith.constant 0 : index
    %12 = vector.load %arg4[%c0_5, %c0_6] : memref<128x32xf32, #tpu.memory_space<vmem>>, vector<128x32xf32>
    %cst = arith.constant dense<0.000000e+00> : vector<128x128xf32>
    %13 = tpu.matmul %7, %12, %cst {dimension_numbers = #tpu.dot_dimension_numbers<[1], [1], [0], [0], [0, 0, 1, 0], [], []>} : vector<128x32xf32>, vector<128x32xf32>, vector<128x128xf32> -> vector<128x128xf32>
    %c0_7 = arith.constant 0 : index
    %c0_8 = arith.constant 0 : index
    %14 = vector.load %arg6[%c0_7, %c0_8] : memref<128x128xf32, #tpu.memory_space<vmem>>, vector<128x128xf32>
    tpu.vector_store %arg6[%c0_7, %c0_8], %13 {strides = array<i32>} : memref<128x128xf32, #tpu.memory_space<vmem>>, vector<128x128xf32>,
    %15 = arith.mulf %7, %11 : vector<128x32xf32>
    %cst_9 = arith.constant dense<0.000000e+00> : vector<128xf32>
    %16 = vector.multi_reduction <add>, %15, %cst_9 [1] : vector<128x32xf32> to vector<128xf32>
    %17 = vector.shape_cast %16 : vector<128xf32> to vector<128x1xf32>
    %18 = tpu.iota {dimensions = array<i32: 1>} : vector<128x128xi32>
    %19 = tpu.iota {dimensions = array<i32: 0>} : vector<128x1xi32>
    %20 = vector.broadcast %9 : i32 to vector<128x1xi32>
    %21 = arith.addi %20, %19 : vector<128x1xi32>
    %22 = vector.broadcast %0 : i32 to vector<128x1xi32>
    %23 = arith.cmpi slt, %21, %22 : vector<128x1xi32>
    %24 = vector.broadcast %0 : i32 to vector<128x128xi32>
    %25 = arith.cmpi slt, %18, %24 : vector<128x128xi32>
    %26 = vector.broadcast %23 : vector<128x1xi1> to vector<128x128xi1>
    %27 = arith.andi %25, %26 : vector<128x128xi1>
    %cst_10 = arith.constant -1.000000e+30 : f32
    %28 = vector.broadcast %cst_10 : f32 to vector<128x128xf32>
    %29 = arith.select %27, %13, %28 : vector<128x128xi1>, vector<128x128xf32>
    %30 = arith.extui %23 : vector<128x1xi1> to vector<128x1xi32>
    %31 = arith.sitofp %30 : vector<128x1xi32> to vector<128x1xf32>
    %cst_11 = arith.constant dense<0xFF800000> : vector<128xf32>
    %32 = vector.multi_reduction <maximumf>, %29, %cst_11 [1] : vector<128x128xf32> to vector<128xf32>
    %33 = vector.shape_cast %32 : vector<128xf32> to vector<128x1xf32>
    %34 = vector.broadcast %33 : vector<128x1xf32> to vector<128x128xf32>
    %35 = arith.subf %29, %34 : vector<128x128xf32>
    %36 = math.exp %35 : vector<128x128xf32>
    %cst_12 = arith.constant dense<0.000000e+00> : vector<128xf32>
    %37 = vector.multi_reduction <add>, %36, %cst_12 [1] : vector<128x128xf32> to vector<128xf32>
    %38 = vector.shape_cast %37 : vector<128xf32> to vector<128x1xf32>
    %39 = math.log %38 : vector<128x1xf32>
    %40 = arith.addf %33, %39 : vector<128x1xf32>
    %c0_13 = arith.constant 0 : index
    %c0_14 = arith.constant 0 : index
    %41 = vector.load %arg9[%c0_13, %c0_14] : memref<1x1xf32, #tpu.memory_space<vmem>>, vector<1x1xf32>
    %42 = arith.subf %40, %17 : vector<128x1xf32>
    %43 = arith.mulf %42, %31 : vector<128x1xf32>
    %44 = vector.shape_cast %43 : vector<128x1xf32> to vector<1x128x1xf32>
    %cst_15 = arith.constant dense<0.000000e+00> : vector<1xf32>
    %45 = vector.multi_reduction <add>, %44, %cst_15 [1, 2] : vector<1x128x1xf32> to vector<1xf32>
    %46 = vector.shape_cast %45 : vector<1xf32> to vector<1x1x1xf32>
    %47 = vector.extract %46[0, 0, 0] : f32 from vector<1x1x1xf32>
    %48 = vector.broadcast %47 : f32 to vector<1x1xf32>
    %49 = arith.addf %41, %48 : vector<1x1xf32>
    %c0_16 = arith.constant 0 : index
    %c0_17 = arith.constant 0 : index
    %50 = vector.load %arg9[%c0_16, %c0_17] : memref<1x1xf32, #tpu.memory_space<vmem>>, vector<1x1xf32>
    tpu.vector_store %arg9[%c0_16, %c0_17], %49 {strides = array<i32>} : memref<1x1xf32, #tpu.memory_space<vmem>>, vector<1x1xf32>,
    %c0_18 = arith.constant 0 : index
    %c0_19 = arith.constant 0 : index
    %51 = vector.load %arg10[%c0_18, %c0_19] : memref<1x1xf32, #tpu.memory_space<vmem>>, vector<1x1xf32>
    %52 = arith.mulf %17, %31 : vector<128x1xf32>
    %53 = vector.shape_cast %52 : vector<128x1xf32> to vector<1x128x1xf32>
    %cst_20 = arith.constant dense<0.000000e+00> : vector<1xf32>
    %54 = vector.multi_reduction <add>, %53, %cst_20 [1, 2] : vector<1x128x1xf32> to vector<1xf32>
    %55 = vector.shape_cast %54 : vector<1xf32> to vector<1x1x1xf32>
    %56 = vector.extract %55[0, 0, 0] : f32 from vector<1x1x1xf32>
    %57 = vector.broadcast %56 : f32 to vector<1x1xf32>
    %58 = arith.addf %51, %57 : vector<1x1xf32>
    %c0_21 = arith.constant 0 : index
    %c0_22 = arith.constant 0 : index
    %59 = vector.load %arg10[%c0_21, %c0_22] : memref<1x1xf32, #tpu.memory_space<vmem>>, vector<1x1xf32>
    tpu.vector_store %arg10[%c0_21, %c0_22], %58 {strides = array<i32>} : memref<1x1xf32, #tpu.memory_space<vmem>>, vector<1x1xf32>,
    %cst_23 = arith.constant dense<0xFF800000> : vector<128xf32>
    %60 = vector.multi_reduction <maximumf>, %29, %cst_23 [0] : vector<128x128xf32> to vector<128xf32>
    %61 = vector.shape_cast %60 : vector<128xf32> to vector<1x128xf32>
    %c0_24 = arith.constant 0 : index
    %c0_25 = arith.constant 0 : index
    %62 = vector.load %arg7[%c0_24, %c0_25] : memref<1x128xf32, #tpu.memory_space<vmem>>, vector<1x128xf32>
    %63 = arith.maximumf %62, %61 : vector<1x128xf32>
    %c0_26 = arith.constant 0 : index
    %c0_27 = arith.constant 0 : index
    %64 = vector.load %arg8[%c0_26, %c0_27] : memref<1x128xf32, #tpu.memory_space<vmem>>, vector<1x128xf32>
    %c0_28 = arith.constant 0 : index
    %c0_29 = arith.constant 0 : index
    %65 = vector.load %arg7[%c0_28, %c0_29] : memref<1x128xf32, #tpu.memory_space<vmem>>, vector<1x128xf32>
    %66 = arith.subf %65, %63 : vector<1x128xf32>
    %67 = math.exp %66 : vector<1x128xf32>
    %68 = arith.mulf %64, %67 : vector<1x128xf32>
    %69 = vector.broadcast %63 : vector<1x128xf32> to vector<128x128xf32>
    %70 = arith.subf %29, %69 : vector<128x128xf32>
    %71 = math.exp %70 : vector<128x128xf32>
    %cst_30 = arith.constant dense<0.000000e+00> : vector<128xf32>
    %72 = vector.multi_reduction <add>, %71, %cst_30 [0] : vector<128x128xf32> to vector<128xf32>
    %73 = vector.shape_cast %72 : vector<128xf32> to vector<1x128xf32>
    %74 = arith.addf %68, %73 : vector<1x128xf32>
    %c0_31 = arith.constant 0 : index
    %c0_32 = arith.constant 0 : index
    %75 = vector.load %arg8[%c0_31, %c0_32] : memref<1x128xf32, #tpu.memory_space<vmem>>, vector<1x128xf32>
    tpu.vector_store %arg8[%c0_31, %c0_32], %74 {strides = array<i32>} : memref<1x128xf32, #tpu.memory_space<vmem>>, vector<1x128xf32>,
    %c0_33 = arith.constant 0 : index
    %c0_34 = arith.constant 0 : index
    %76 = vector.load %arg7[%c0_33, %c0_34] : memref<1x128xf32, #tpu.memory_space<vmem>>, vector<1x128xf32>
    tpu.vector_store %arg7[%c0_33, %c0_34], %63 {strides = array<i32>} : memref<1x128xf32, #tpu.memory_space<vmem>>, vector<1x128xf32>,
    %c0_i32_35 = arith.constant 0 : i32
    %77 = arith.cmpi eq, %arg0, %c0_i32_35 : i32
    %78 = arith.extui %77 : i1 to i32
    %c0_i32_36 = arith.constant 0 : i32
    %79 = arith.cmpi ne, %78, %c0_i32_36 : i32
    scf.if %79 {
      %c0_37 = arith.constant 0 : index
      %c0_38 = arith.constant 0 : index
      %80 = vector.load %arg7[%c0_37, %c0_38] : memref<1x128xf32, #tpu.memory_space<vmem>>, vector<1x128xf32>
      %c0_39 = arith.constant 0 : index
      %c0_40 = arith.constant 0 : index
      %81 = vector.load %arg8[%c0_39, %c0_40] : memref<1x128xf32, #tpu.memory_space<vmem>>, vector<1x128xf32>
      %82 = math.log %81 : vector<1x128xf32>
      %83 = arith.addf %80, %82 : vector<1x128xf32>
      %84 = tpu.iota {dimensions = array<i32: 1>} : vector<1x128xi32>
      %85 = vector.broadcast %0 : i32 to vector<1x128xi32>
      %86 = arith.cmpi slt, %84, %85 : vector<1x128xi32>
      %cst_41 = arith.constant 0.000000e+00 : f32
      %87 = vector.broadcast %cst_41 : f32 to vector<1x128xf32>
      %88 = arith.select %86, %83, %87 : vector<1x128xi1>, vector<1x128xf32>
      %89 = vector.shape_cast %88 : vector<1x128xf32> to vector<1x1x128xf32>
      %cst_42 = arith.constant dense<0.000000e+00> : vector<1xf32>
      %90 = vector.multi_reduction <add>, %89, %cst_42 [1, 2] : vector<1x1x128xf32> to vector<1xf32>
      %91 = vector.shape_cast %90 : vector<1xf32> to vector<1x1x1xf32>
      %92 = vector.extract %91[0, 0, 0] : f32 from vector<1x1x1xf32>
      %93 = vector.broadcast %92 : f32 to vector<1x1xf32>
      %94 = arith.sitofp %0 : i32 to f32
      %c0_43 = arith.constant 0 : index
      %c0_44 = arith.constant 0 : index
      %95 = vector.load %arg9[%c0_43, %c0_44] : memref<1x1xf32, #tpu.memory_space<vmem>>, vector<1x1xf32>
      %96 = vector.broadcast %94 : f32 to vector<1x1xf32>
      %97 = arith.divf %95, %96 : vector<1x1xf32>
      %c0_45 = arith.constant 0 : index
      %c0_46 = arith.constant 0 : index
      %98 = vector.load %arg10[%c0_45, %c0_46] : memref<1x1xf32, #tpu.memory_space<vmem>>, vector<1x1xf32>
      %99 = arith.subf %93, %98 : vector<1x1xf32>
      %100 = vector.broadcast %94 : f32 to vector<1x1xf32>
      %101 = arith.divf %99, %100 : vector<1x1xf32>
      %102 = arith.addf %97, %101 : vector<1x1xf32>
      %cst_47 = arith.constant 5.000000e-01 : f32
      %103 = vector.broadcast %cst_47 : f32 to vector<1x1xf32>
      %104 = arith.mulf %103, %102 : vector<1x1xf32>
      %c0_48 = arith.constant 0 : index
      %c0_49 = arith.constant 0 : index
      %105 = vector.load %arg5[%c0_48, %c0_49] : memref<1x1xf32, #tpu.memory_space<vmem>>, vector<1x1xf32>
      tpu.vector_store %arg5[%c0_48, %c0_49], %104 {strides = array<i32>} : memref<1x1xf32, #tpu.memory_space<vmem>>, vector<1x1xf32>,
    } else {
    }
    return
  }
  func.func @transform_0(%arg0: i32) -> i32 {
    %c0_i32 = arith.constant 0 : i32
    %c0_i32_0 = arith.constant 0 : i32
    return %c0_i32 : i32
  }
  func.func @transform_1(%arg0: i32) -> i32 {
    %c0_i32 = arith.constant 0 : i32
    %c0_i32_0 = arith.constant 0 : i32
    return %c0_i32 : i32
  }
  func.func @transform_2(%arg0: i32) -> (i32, i32) {
    %c0_i32 = arith.constant 0 : i32
    %c0_i32_0 = arith.constant 0 : i32
    return %arg0, %c0_i32 : i32, i32
  }
  func.func @transform_3(%arg0: i32) -> (i32, i32) {
    %c0_i32 = arith.constant 0 : i32
    %c0_i32_0 = arith.constant 0 : i32
    %c0_i32_1 = arith.constant 0 : i32
    return %c0_i32, %c0_i32_0 : i32, i32
  }
  func.func @transform_4(%arg0: i32) -> (i32, i32) {
    %c0_i32 = arith.constant 0 : i32
    %c0_i32_0 = arith.constant 0 : i32
    %c0_i32_1 = arith.constant 0 : i32
    return %c0_i32, %c0_i32_0 : i32, i32
  }
  func.func @transform_5(%arg0: i32) -> (i32, i32) {
    %c0_i32 = arith.constant 0 : i32
    %c0_i32_0 = arith.constant 0 : i32
    return %arg0, %c0_i32 : i32, i32
  }
}

</mosaic_0001>

<llo_original>
// kernel: tpu_custom_call.1
$region0: #{tpu_custom_call.1}
  #allocation0 [shape = 'u32[]', space=smem, size = 0x4, offset = 0x4, fixed_abs, tag = 'smem constant byte address 0x4 - core index']
  #allocation1 [shape = 'u32[144,128]{1,0:T(1,128)}', space=vmem, size = 0x12000, scoped, tag = 'internal scratch']
  #allocation2 [shape = 'f32[1,128]{1,0:T(1,128)}', space=vmem, size = 0x200, scoped, tag = 'scratch operand']
  #allocation3 [shape = 'f32[1,128]{1,0:T(1,128)}', space=vmem, size = 0x200, scoped, tag = 'scratch operand']
  #allocation4 [shape = 'f32[1,1]{1,0:T(1,128)}', space=vmem, size = 0x200, scoped, tag = 'scratch operand']
  #allocation5 [shape = 'f32[1,1]{1,0:T(1,128)}', space=vmem, size = 0x200, scoped, tag = 'scratch operand']
  #allocation6 [shape = 'f32[1]{0:T(128)S(6)}', space=smem, size = 0x200, scoped, tag = 'scoped memory for tpu_custom_call.1']
  #allocation7 [shape = 's32[1]{0:T(128)S(6)}', space=smem, size = 0x200, scoped, tag = 'scoped memory for tpu_custom_call.1']
  %s0 = inlined_call_operand.<no memory space> [shape: f32[1], index: 0, kind: input, shape index: {}]
  %s1 = inlined_call_operand.<no memory space> [shape: s32[1], index: 1, kind: input, shape index: {}]
  %s2 = inlined_call_operand.vmem [shape: f32[128,32], index: 2, kind: input, shape index: {}]
  %s3 = inlined_call_operand.vmem [shape: f32[128,32], index: 3, kind: input, shape index: {}]
  %s4 = inlined_call_operand.hbm [shape: f32[1,1], index: 4, kind: output, shape index: {0}]
  %s5 = inlined_call_operand.hbm [shape: f32[128,128], index: 5, kind: output, shape index: {1}]
  %6 = xla_tuple %s4, %s5
  %s7 = sld [smem:[#allocation0]]
  $region42: #{tpu_custom_call.1} parent=0
    _
  %s9 = ssub.s32 1, %s7
  %s10 = scalar_select 0, %s9, %s7
  %11 = sst [smem:[#allocation6]] %s0
  %12 = sst [smem:[#allocation7]] %s1
  $region1: #{tpu_custom_call.1} parent=0
    #allocation8 [shape = 'u8[512]{0}', space=vmem, size = 0x400, scoped, tag = 'output window, operand 0, single buffered']
    #allocation9 [shape = 's32[1]{0}', space=sflag, size = 0x4, scoped, tag = 'scoped memory for tpu_custom_call.1']
    #allocation10 [shape = 'u8[65536]{0}', space=vmem, size = 0x10000, scoped, tag = 'output window, operand 1, single buffered']
    #allocation11 [shape = 's32[1]{0}', space=sflag, size = 0x4, scoped, tag = 'scoped memory for tpu_custom_call.1']
    %13 = vsyncpa [#allocation9], 0
    %14 = vsyncpa [#allocation11], 0
    // Predicated region
    $region2: #{tpu_custom_call.1} parent=1 // pred_check
      _
    $region3: #{tpu_custom_call.1} parent=1 // pred_check_branch
      %16 = sbr.rel (0) target = $region5
    $region4: #{tpu_custom_call.1} parent=1 // pred_region
      _
    $region5: #{tpu_custom_call.1} parent=1 // pred_fallthru
      _
    // Predicated region
    $region6: #{tpu_custom_call.1} parent=1 // pred_check
      _
    $region7: #{tpu_custom_call.1} parent=1 // pred_check_branch
      %18 = sbr.rel (0) target = $region9
    $region8: #{tpu_custom_call.1} parent=1 // pred_region
      _
    $region9: #{tpu_custom_call.1} parent=1 // pred_fallthru
      _
    // Predicated region
    $region10: #{tpu_custom_call.1} parent=1 // pred_check
      _
    $region11: #{tpu_custom_call.1} parent=1 // pred_check_branch
      %20 = sbr.rel (0) target = $region13
    $region12: #{tpu_custom_call.1} parent=1 // pred_region
      _
    $region13: #{tpu_custom_call.1} parent=1 // pred_fallthru
      _
    // Predicated region
    $region14: #{tpu_custom_call.1} parent=1 // pred_check
      _
    $region15: #{tpu_custom_call.1} parent=1 // pred_check_branch
      %22 = sbr.rel (0) target = $region17
    $region16: #{tpu_custom_call.1} parent=1 // pred_region
      _
    $region17: #{tpu_custom_call.1} parent=1 // pred_fallthru
      _
    %s23 = sld [smem:[#allocation7]]
    %p24 = scmp.eq.s32.totalorder 0, 0
    // Predicated region
    $region18: #{tpu_custom_call.1} parent=1 // pred_check
      %p25 = pneg %p24
    $region19: #{tpu_custom_call.1} parent=1 // pred_check_branch
      %27 = sbr.rel (%p25) target = $region21
    $region20: #{tpu_custom_call.1} parent=1 // pred_region
      %28 = vst [vmem:[#allocation2] sm:$0x1] -1e+30
      %29 = vst [vmem:[#allocation3] sm:$0x1] 0.0
      %vm30 = vcmask 0
      %31 = vst.msk [vmem:[#allocation4] sm:$0x1] %vm30, 0.0
      %32 = vst.msk [vmem:[#allocation5] sm:$0x1] %vm30, 0.0
      %33 = vst.msk [vmem:[#allocation8] sm:$0x1] %vm30, 0.0
    $region21: #{tpu_custom_call.1} parent=1 // pred_fallthru
      _
    %s34 = sld [smem:[#allocation6]]
    %v35 = vld [vmem:[%s2] sm:$0xff]
    %v36 = vld [vmem:[%s2 + $0x8] sm:$0xff]
    %v37 = vld [vmem:[%s2 + $0x10] sm:$0xff]
    %v38 = vld [vmem:[%s2 + $0x18] sm:$0xff]
    %v39 = vld [vmem:[%s2 + $0x20] sm:$0xff]
    %v40 = vld [vmem:[%s2 + $0x28] sm:$0xff]
    %v41 = vld [vmem:[%s2 + $0x30] sm:$0xff]
    %v42 = vld [vmem:[%s2 + $0x38] sm:$0xff]
    %v43 = vld [vmem:[%s2 + $0x40] sm:$0xff]
    %v44 = vld [vmem:[%s2 + $0x48] sm:$0xff]
    %v45 = vld [vmem:[%s2 + $0x50] sm:$0xff]
    %v46 = vld [vmem:[%s2 + $0x58] sm:$0xff]
    %v47 = vld [vmem:[%s2 + $0x60] sm:$0xff]
    %v48 = vld [vmem:[%s2 + $0x68] sm:$0xff]
    %v49 = vld [vmem:[%s2 + $0x70] sm:$0xff]
    %v50 = vld [vmem:[%s2 + $0x78] sm:$0xff]
    %v51 = vstv %s34
    %v52 = vmul.f32 %v35, %v51
    %v53 = vmul.f32 %v36, %v51
    %v54 = vmul.f32 %v37, %v51
    %v55 = vmul.f32 %v38, %v51
    %v56 = vmul.f32 %v39, %v51
    %v57 = vmul.f32 %v40, %v51
    %v58 = vmul.f32 %v41, %v51
    %v59 = vmul.f32 %v42, %v51
    %v60 = vmul.f32 %v43, %v51
    %v61 = vmul.f32 %v44, %v51
    %v62 = vmul.f32 %v45, %v51
    %v63 = vmul.f32 %v46, %v51
    %v64 = vmul.f32 %v47, %v51
    %v65 = vmul.f32 %v48, %v51
    %v66 = vmul.f32 %v49, %v51
    %v67 = vmul.f32 %v50, %v51
    %s68 = smul.u32 0, 128
    %s69 = scalar_lea.vmem %s3, %s68
    %v70 = vld [vmem:[%s69] sm:$0xff]
    %v71 = vld [vmem:[%s69 + $0x8] sm:$0xff]
    %v72 = vld [vmem:[%s69 + $0x10] sm:$0xff]
    %v73 = vld [vmem:[%s69 + $0x18] sm:$0xff]
    %v74 = vld [vmem:[%s69 + $0x20] sm:$0xff]
    %v75 = vld [vmem:[%s69 + $0x28] sm:$0xff]
    %v76 = vld [vmem:[%s69 + $0x30] sm:$0xff]
    %v77 = vld [vmem:[%s69 + $0x38] sm:$0xff]
    %v78 = vld [vmem:[%s69 + $0x40] sm:$0xff]
    %v79 = vld [vmem:[%s69 + $0x48] sm:$0xff]
    %v80 = vld [vmem:[%s69 + $0x50] sm:$0xff]
    %v81 = vld [vmem:[%s69 + $0x58] sm:$0xff]
    %v82 = vld [vmem:[%s69 + $0x60] sm:$0xff]
    %v83 = vld [vmem:[%s69 + $0x68] sm:$0xff]
    %v84 = vld [vmem:[%s69 + $0x70] sm:$0xff]
    %v85 = vld [vmem:[%s69 + $0x78] sm:$0xff]
    %v86 = vld [vmem:[%s3] sm:$0xff]
    %v87 = vld [vmem:[%s3 + $0x8] sm:$0xff]
    %v88 = vld [vmem:[%s3 + $0x10] sm:$0xff]
    %v89 = vld [vmem:[%s3 + $0x18] sm:$0xff]
    %v90 = vld [vmem:[%s3 + $0x20] sm:$0xff]
    %v91 = vld [vmem:[%s3 + $0x28] sm:$0xff]
    %v92 = vld [vmem:[%s3 + $0x30] sm:$0xff]
    %v93 = vld [vmem:[%s3 + $0x38] sm:$0xff]
    %v94 = vld [vmem:[%s3 + $0x40] sm:$0xff]
    %v95 = vld [vmem:[%s3 + $0x48] sm:$0xff]
    %v96 = vld [vmem:[%s3 + $0x50] sm:$0xff]
    %v97 = vld [vmem:[%s3 + $0x58] sm:$0xff]
    %v98 = vld [vmem:[%s3 + $0x60] sm:$0xff]
    %v99 = vld [vmem:[%s3 + $0x68] sm:$0xff]
    %v100 = vld [vmem:[%s3 + $0x70] sm:$0xff]
    %v101 = vld [vmem:[%s3 + $0x78] sm:$0xff]
    %vm102 = vcmask 261120
    %v104 = vsel %vm102, %v52, 0
    %v107 = vsel %vm102, %v53, 0
    %v110 = vsel %vm102, %v54, 0
    %v113 = vsel %vm102, %v55, 0
    %v116 = vsel %vm102, %v56, 0
    %v119 = vsel %vm102, %v57, 0
    %v122 = vsel %vm102, %v58, 0
    %v125 = vsel %vm102, %v59, 0
    %v128 = vsel %vm102, %v60, 0
    %v131 = vsel %vm102, %v61, 0
    %v134 = vsel %vm102, %v62, 0
    %v137 = vsel %vm102, %v63, 0
    %v140 = vsel %vm102, %v64, 0
    %v143 = vsel %vm102, %v65, 0
    %v146 = vsel %vm102, %v66, 0
    %v149 = vsel %vm102, %v67, 0
    %v152 = vsel %vm102, %v86, 0
    %v155 = vsel %vm102, %v87, 0
    %v158 = vsel %vm102, %v88, 0
    %v161 = vsel %vm102, %v89, 0
    %v164 = vsel %vm102, %v90, 0
    %v167 = vsel %vm102, %v91, 0
    %v170 = vsel %vm102, %v92, 0
    %v173 = vsel %vm102, %v93, 0
    %v176 = vsel %vm102, %v94, 0
    %v179 = vsel %vm102, %v95, 0
    %v182 = vsel %vm102, %v96, 0
    %v185 = vsel %vm102, %v97, 0
    %v188 = vsel %vm102, %v98, 0
    %v191 = vsel %vm102, %v99, 0
    %v194 = vsel %vm102, %v100, 0
    %v197 = vsel %vm102, %v101, 0
    %199 = vmatprep.subr.mxu0 0.0
    %200 = vmatpush1.xpose.msra.mxu0 %v152
    %201 = vmatprep.subr.mxu0 0.0
    %202 = vmatpush1.xpose.msra.mxu0 %v155
    %203 = vmatprep.subr.mxu0 0.0
    %204 = vmatpush1.xpose.msra.mxu0 %v158
    %205 = vmatprep.subr.mxu0 0.0
    %206 = vmatpush1.xpose.msra.mxu0 %v161
    %207 = vmatprep.subr.mxu0 0.0
    %208 = vmatpush1.xpose.msra.mxu0 %v164
    %209 = vmatprep.subr.mxu0 0.0
    %210 = vmatpush1.xpose.msra.mxu0 %v167
    %211 = vmatprep.subr.mxu0 0.0
    %212 = vmatpush1.xpose.msra.mxu0 %v170
    %213 = vmatprep.subr.mxu0 0.0
    %214 = vmatpush1.xpose.msra.mxu0 %v173
    %215 = vmatprep.subr.mxu0 0.0
    %216 = vmatpush1.xpose.msra.mxu0 %v176
    %217 = vmatprep.subr.mxu0 0.0
    %218 = vmatpush1.xpose.msra.mxu0 %v179
    %219 = vmatprep.subr.mxu0 0.0
    %220 = vmatpush1.xpose.msra.mxu0 %v182
    %221 = vmatprep.subr.mxu0 0.0
    %222 = vmatpush1.xpose.msra.mxu0 %v185
    %223 = vmatprep.subr.mxu0 0.0
    %224 = vmatpush1.xpose.msra.mxu0 %v188
    %225 = vmatprep.subr.mxu0 0.0
    %226 = vmatpush1.xpose.msra.mxu0 %v191
    %227 = vmatprep.subr.mxu0 0.0
    %228 = vmatpush1.xpose.msra.mxu0 %v194
    %229 = vmatprep.subr.mxu0 0.0
    %230 = vmatpush1.xpose.msra.mxu0 %v197
    %231 = vmatprep.subr.mxu0 0.0
    %232 = vmatpush1.xpose.msra.mxu0 0.0
    %233 = vmatprep.subr.mxu0 0.0
    %234 = vmatpush1.xpose.msra.mxu0 0.0
    %235 = vmatprep.subr.mxu0 0.0
    %236 = vmatpush1.xpose.msra.mxu0 0.0
    %237 = vmatprep.subr.mxu0 0.0
    %238 = vmatpush1.xpose.msra.mxu0 0.0
    %239 = vmatprep.subr.mxu0 0.0
    %240 = vmatpush1.xpose.msra.mxu0 0.0
    %241 = vmatprep.subr.mxu0 0.0
    %242 = vmatpush1.xpose.msra.mxu0 0.0
    %243 = vmatprep.subr.mxu0 0.0
    %244 = vmatpush1.xpose.msra.mxu0 0.0
    %245 = vmatprep.subr.mxu0 0.0
    %246 = vmatpush1.xpose.msra.mxu0 0.0
    %247 = vmatprep.subr.mxu0 0.0
    %248 = vmatpush1.xpose.msra.mxu0 0.0
    %249 = vmatprep.subr.mxu0 0.0
    %250 = vmatpush1.xpose.msra.mxu0 0.0
    %251 = vmatprep.subr.mxu0 0.0
    %252 = vmatpush1.xpose.msra.mxu0 0.0
    %253 = vmatprep.subr.mxu0 0.0
    %254 = vmatpush1.xpose.msra.mxu0 0.0
    %255 = vmatprep.subr.mxu0 0.0
    %256 = vmatpush1.xpose.msra.mxu0 0.0
    %257 = vmatprep.subr.mxu0 0.0
    %258 = vmatpush1.xpose.msra.mxu0 0.0
    %259 = vmatprep.subr.mxu0 0.0
    %260 = vmatpush1.xpose.msra.mxu0 0.0
    %261 = vmatprep.subr.mxu0 0.0
    %262 = vmatpush1.xpose.msra.mxu0 0.0
    %263 = vmatprep.mubr.f32.mxu0 0.0
    %264 = vmatmul.mubr.f32.gmra.mrb[0].mxu0 %v104
    %v265 = vpop.f32.mrb[0].mxu0
    %v266 = vadd.f32 0.0, %v265
    %v267 = vpop.f32.mrb[0].mxu0
    %268 = vmatprep.mubr.f32.mxu0 0.0
    %269 = vmatmul.mubr.f32.gmra.mrb[0].mxu0 %v107
    %v270 = vpop.f32.mrb[0].mxu0
    %v271 = vadd.f32 0.0, %v270
    %v272 = vpop.f32.mrb[0].mxu0
    %273 = vmatprep.mubr.f32.mxu0 0.0
    %274 = vmatmul.mubr.f32.gmra.mrb[0].mxu0 %v110
    %v275 = vpop.f32.mrb[0].mxu0
    %v276 = vadd.f32 0.0, %v275
    %v277 = vpop.f32.mrb[0].mxu0
    %278 = vmatprep.mubr.f32.mxu0 0.0
    %279 = vmatmul.mubr.f32.gmra.mrb[0].mxu0 %v113
    %v280 = vpop.f32.mrb[0].mxu0
    %v281 = vadd.f32 0.0, %v280
    %v282 = vpop.f32.mrb[0].mxu0
    %283 = vmatprep.mubr.f32.mxu0 0.0
    %284 = vmatmul.mubr.f32.gmra.mrb[0].mxu0 %v116
    %v285 = vpop.f32.mrb[0].mxu0
    %v286 = vadd.f32 0.0, %v285
    %v287 = vpop.f32.mrb[0].mxu0
    %288 = vmatprep.mubr.f32.mxu0 0.0
    %289 = vmatmul.mubr.f32.gmra.mrb[0].mxu0 %v119
    %v290 = vpop.f32.mrb[0].mxu0
    %v291 = vadd.f32 0.0, %v290
    %v292 = vpop.f32.mrb[0].mxu0
    %293 = vmatprep.mubr.f32.mxu0 0.0
    %294 = vmatmul.mubr.f32.gmra.mrb[0].mxu0 %v122
    %v295 = vpop.f32.mrb[0].mxu0
    %v296 = vadd.f32 0.0, %v295
    %v297 = vpop.f32.mrb[0].mxu0
    %298 = vmatprep.mubr.f32.mxu0 0.0
    %299 = vmatmul.mubr.f32.gmra.mrb[0].mxu0 %v125
    %v300 = vpop.f32.mrb[0].mxu0
    %v301 = vadd.f32 0.0, %v300
    %v302 = vpop.f32.mrb[0].mxu0
    %303 = vmatprep.mubr.f32.mxu0 0.0
    %304 = vmatmul.mubr.f32.gmra.mrb[0].mxu0 %v128
    %v305 = vpop.f32.mrb[0].mxu0
    %v306 = vadd.f32 0.0, %v305
    %v307 = vpop.f32.mrb[0].mxu0
    %308 = vmatprep.mubr.f32.mxu0 0.0
    %309 = vmatmul.mubr.f32.gmra.mrb[0].mxu0 %v131
    %v310 = vpop.f32.mrb[0].mxu0
    %v311 = vadd.f32 0.0, %v310
    %v312 = vpop.f32.mrb[0].mxu0
    %313 = vmatprep.mubr.f32.mxu0 0.0
    %314 = vmatmul.mubr.f32.gmra.mrb[0].mxu0 %v134
    %v315 = vpop.f32.mrb[0].mxu0
    %v316 = vadd.f32 0.0, %v315
    %v317 = vpop.f32.mrb[0].mxu0
    %318 = vmatprep.mubr.f32.mxu0 0.0
    %319 = vmatmul.mubr.f32.gmra.mrb[0].mxu0 %v137
    %v320 = vpop.f32.mrb[0].mxu0
    %v321 = vadd.f32 0.0, %v320
    %v322 = vpop.f32.mrb[0].mxu0
    %323 = vmatprep.mubr.f32.mxu0 0.0
    %324 = vmatmul.mubr.f32.gmra.mrb[0].mxu0 %v140
    %v325 = vpop.f32.mrb[0].mxu0
    %v326 = vadd.f32 0.0, %v325
    %v327 = vpop.f32.mrb[0].mxu0
    %328 = vmatprep.mubr.f32.mxu0 0.0
    %329 = vmatmul.mubr.f32.gmra.mrb[0].mxu0 %v143
    %v330 = vpop.f32.mrb[0].mxu0
    %v331 = vadd.f32 0.0, %v330
    %v332 = vpop.f32.mrb[0].mxu0
    %333 = vmatprep.mubr.f32.mxu0 0.0
    %334 = vmatmul.mubr.f32.gmra.mrb[0].mxu0 %v146
    %v335 = vpop.f32.mrb[0].mxu0
    %v336 = vadd.f32 0.0, %v335
    %v337 = vpop.f32.mrb[0].mxu0
    %338 = vmatprep.mubr.f32.mxu0 0.0
    %339 = vmatmul.mubr.f32.gmra.mrb[0].mxu0 %v149
    %v340 = vpop.f32.mrb[0].mxu0
    %v341 = vadd.f32 0.0, %v340
    %v342 = vpop.f32.mrb[0].mxu0
    %343 = vdwg.mxu0
    %344 = vst [vmem:[#allocation10] sm:$0xff] %v266
    %345 = vst [vmem:[#allocation10 + $0x8] sm:$0xff] %v271
    %346 = vst [vmem:[#allocation10 + $0x10] sm:$0xff] %v276
    %347 = vst [vmem:[#allocation10 + $0x18] sm:$0xff] %v281
    %348 = vst [vmem:[#allocation10 + $0x20] sm:$0xff] %v286
    %349 = vst [vmem:[#allocation10 + $0x28] sm:$0xff] %v291
    %350 = vst [vmem:[#allocation10 + $0x30] sm:$0xff] %v296
    %351 = vst [vmem:[#allocation10 + $0x38] sm:$0xff] %v301
    %352 = vst [vmem:[#allocation10 + $0x40] sm:$0xff] %v306
    %353 = vst [vmem:[#allocation10 + $0x48] sm:$0xff] %v311
    %354 = vst [vmem:[#allocation10 + $0x50] sm:$0xff] %v316
    %355 = vst [vmem:[#allocation10 + $0x58] sm:$0xff] %v321
    %356 = vst [vmem:[#allocation10 + $0x60] sm:$0xff] %v326
    %357 = vst [vmem:[#allocation10 + $0x68] sm:$0xff] %v331
    %358 = vst [vmem:[#allocation10 + $0x70] sm:$0xff] %v336
    %359 = vst [vmem:[#allocation10 + $0x78] sm:$0xff] %v341
    %v360 = vmul.f32 %v52, %v70
    %v361 = vmul.f32 %v53, %v71
    %v362 = vmul.f32 %v54, %v72
    %v363 = vmul.f32 %v55, %v73
    %v364 = vmul.f32 %v56, %v74
    %v365 = vmul.f32 %v57, %v75
    %v366 = vmul.f32 %v58, %v76
    %v367 = vmul.f32 %v59, %v77
    %v368 = vmul.f32 %v60, %v78
    %v369 = vmul.f32 %v61, %v79
    %v370 = vmul.f32 %v62, %v80
    %v371 = vmul.f32 %v63, %v81
    %v372 = vmul.f32 %v64, %v82
    %v373 = vmul.f32 %v65, %v83
    %v374 = vmul.f32 %v66, %v84
    %v375 = vmul.f32 %v67, %v85
    %v376 = vsel %vm102, %v360, 0.0
    %377 = vadd.xlane.f32.xlu0 %v376
    %v378 = vpop.xlane.xlu0 %377
    %v379 = vsel %vm102, %v361, 0.0
    %380 = vadd.xlane.f32.xlu0 %v379
    %v381 = vpop.xlane.xlu0 %380
    %v382 = vsel %vm102, %v362, 0.0
    %383 = vadd.xlane.f32.xlu0 %v382
    %v384 = vpop.xlane.xlu0 %383
    %v385 = vsel %vm102, %v363, 0.0
    %386 = vadd.xlane.f32.xlu0 %v385
    %v387 = vpop.xlane.xlu0 %386
    %v388 = vsel %vm102, %v364, 0.0
    %389 = vadd.xlane.f32.xlu0 %v388
    %v390 = vpop.xlane.xlu0 %389
    %v391 = vsel %vm102, %v365, 0.0
    %392 = vadd.xlane.f32.xlu0 %v391
    %v393 = vpop.xlane.xlu0 %392
    %v394 = vsel %vm102, %v366, 0.0
    %395 = vadd.xlane.f32.xlu0 %v394
    %v396 = vpop.xlane.xlu0 %395
    %v397 = vsel %vm102, %v367, 0.0
    %398 = vadd.xlane.f32.xlu0 %v397
    %v399 = vpop.xlane.xlu0 %398
    %v400 = vsel %vm102, %v368, 0.0
    %401 = vadd.xlane.f32.xlu0 %v400
    %v402 = vpop.xlane.xlu0 %401
    %v403 = vsel %vm102, %v369, 0.0
    %404 = vadd.xlane.f32.xlu0 %v403
    %v405 = vpop.xlane.xlu0 %404
    %v406 = vsel %vm102, %v370, 0.0
    %407 = vadd.xlane.f32.xlu0 %v406
    %v408 = vpop.xlane.xlu0 %407
    %v409 = vsel %vm102, %v371, 0.0
    %410 = vadd.xlane.f32.xlu0 %v409
    %v411 = vpop.xlane.xlu0 %410
    %v412 = vsel %vm102, %v372, 0.0
    %413 = vadd.xlane.f32.xlu0 %v412
    %v414 = vpop.xlane.xlu0 %413
    %v415 = vsel %vm102, %v373, 0.0
    %416 = vadd.xlane.f32.xlu0 %v415
    %v417 = vpop.xlane.xlu0 %416
    %v418 = vsel %vm102, %v374, 0.0
    %419 = vadd.xlane.f32.xlu0 %v418
    %v420 = vpop.xlane.xlu0 %419
    %v421 = vsel %vm102, %v375, 0.0
    %422 = vadd.xlane.f32.xlu0 %v421
    %v423 = vpop.xlane.xlu0 %422
    %v424 = vlaneseq
    %v425 = vand.u32 %v424, 127
    %v426 = vlaneseq
    %v427 = vshrl.u32 %v426, 7
    %v428 = vadd.s32 %v427, 8
    %v429 = vadd.s32 %v427, 16
    %v430 = vadd.s32 %v427, 24
    %v431 = vadd.s32 %v427, 32
    %v432 = vadd.s32 %v427, 40
    %v433 = vadd.s32 %v427, 48
    %v434 = vadd.s32 %v427, 56
    %v435 = vadd.s32 %v427, 64
    %v436 = vadd.s32 %v427, 72
    %v437 = vadd.s32 %v427, 80
    %v438 = vadd.s32 %v427, 88
    %v439 = vadd.s32 %v427, 96
    %v440 = vadd.s32 %v427, 104
    %v441 = vadd.s32 %v427, 112
    %v442 = vadd.s32 %v427, 120
    %v443 = vstv %s68
    %v444 = vadd.s32 %v443, %v427
    %v445 = vadd.s32 %v443, %v428
    %v446 = vadd.s32 %v443, %v429
    %v447 = vadd.s32 %v443, %v430
    %v448 = vadd.s32 %v443, %v431
    %v449 = vadd.s32 %v443, %v432
    %v450 = vadd.s32 %v443, %v433
    %v451 = vadd.s32 %v443, %v434
    %v452 = vadd.s32 %v443, %v435
    %v453 = vadd.s32 %v443, %v436
    %v454 = vadd.s32 %v443, %v437
    %v455 = vadd.s32 %v443, %v438
    %v456 = vadd.s32 %v443, %v439
    %v457 = vadd.s32 %v443, %v440
    %v458 = vadd.s32 %v443, %v441
    %v459 = vadd.s32 %v443, %v442
    %v460 = vstv %s23
    %vm461 = vcmp.lt.s32.totalorder %v444, %v460
    %vm462 = vcmp.lt.s32.totalorder %v445, %v460
    %vm463 = vcmp.lt.s32.totalorder %v446, %v460
    %vm464 = vcmp.lt.s32.totalorder %v447, %v460
    %vm465 = vcmp.lt.s32.totalorder %v448, %v460
    %vm466 = vcmp.lt.s32.totalorder %v449, %v460
    %vm467 = vcmp.lt.s32.totalorder %v450, %v460
    %vm468 = vcmp.lt.s32.totalorder %v451, %v460
    %vm469 = vcmp.lt.s32.totalorder %v452, %v460
    %vm470 = vcmp.lt.s32.totalorder %v453, %v460
    %vm471 = vcmp.lt.s32.totalorder %v454, %v460
    %vm472 = vcmp.lt.s32.totalorder %v455, %v460
    %vm473 = vcmp.lt.s32.totalorder %v456, %v460
    %vm474 = vcmp.lt.s32.totalorder %v457, %v460
    %vm475 = vcmp.lt.s32.totalorder %v458, %v460
    %vm476 = vcmp.lt.s32.totalorder %v459, %v460
    %vm477 = vcmp.lt.s32.totalorder %v425, %v460
    %v478 = vsel %vm461, 1, 0
    %v479 = vsel %vm462, 1, 0
    %v480 = vsel %vm463, 1, 0
    %v481 = vsel %vm464, 1, 0
    %v482 = vsel %vm465, 1, 0
    %v483 = vsel %vm466, 1, 0
    %v484 = vsel %vm467, 1, 0
    %v485 = vsel %vm468, 1, 0
    %v486 = vsel %vm469, 1, 0
    %v487 = vsel %vm470, 1, 0
    %v488 = vsel %vm471, 1, 0
    %v489 = vsel %vm472, 1, 0
    %v490 = vsel %vm473, 1, 0
    %v491 = vsel %vm474, 1, 0
    %v492 = vsel %vm475, 1, 0
    %v493 = vsel %vm476, 1, 0
    %vm494 = vcmp.eq.s32.totalorder %v478, 1
    %vm495 = vcmp.eq.s32.totalorder %v479, 1
    %vm496 = vcmp.eq.s32.totalorder %v480, 1
    %vm497 = vcmp.eq.s32.totalorder %v481, 1
    %vm498 = vcmp.eq.s32.totalorder %v482, 1
    %vm499 = vcmp.eq.s32.totalorder %v483, 1
    %vm500 = vcmp.eq.s32.totalorder %v484, 1
    %vm501 = vcmp.eq.s32.totalorder %v485, 1
    %vm502 = vcmp.eq.s32.totalorder %v486, 1
    %vm503 = vcmp.eq.s32.totalorder %v487, 1
    %vm504 = vcmp.eq.s32.totalorder %v488, 1
    %vm505 = vcmp.eq.s32.totalorder %v489, 1
    %vm506 = vcmp.eq.s32.totalorder %v490, 1
    %vm507 = vcmp.eq.s32.totalorder %v491, 1
    %vm508 = vcmp.eq.s32.totalorder %v492, 1
    %vm509 = vcmp.eq.s32.totalorder %v493, 1
    %vm510 = vmand %vm477, %vm494
    %vm511 = vmand %vm477, %vm495
    %vm512 = vmand %vm477, %vm496
    %vm513 = vmand %vm477, %vm497
    %vm514 = vmand %vm477, %vm498
    %vm515 = vmand %vm477, %vm499
    %vm516 = vmand %vm477, %vm500
    %vm517 = vmand %vm477, %vm501
    %vm518 = vmand %vm477, %vm502
    %vm519 = vmand %vm477, %vm503
    %vm520 = vmand %vm477, %vm504
    %vm521 = vmand %vm477, %vm505
    %vm522 = vmand %vm477, %vm506
    %vm523 = vmand %vm477, %vm507
    %vm524 = vmand %vm477, %vm508
    %vm525 = vmand %vm477, %vm509
    %v526 = vsel %vm510, %v266, -1e+30
    %v527 = vsel %vm511, %v271, -1e+30
    %v528 = vsel %vm512, %v276, -1e+30
    %v529 = vsel %vm513, %v281, -1e+30
    %v530 = vsel %vm514, %v286, -1e+30
    %v531 = vsel %vm515, %v291, -1e+30
    %v532 = vsel %vm516, %v296, -1e+30
    %v533 = vsel %vm517, %v301, -1e+30
    %v534 = vsel %vm518, %v306, -1e+30
    %v535 = vsel %vm519, %v311, -1e+30
    %v536 = vsel %vm520, %v316, -1e+30
    %v537 = vsel %vm521, %v321, -1e+30
    %v538 = vsel %vm522, %v326, -1e+30
    %v539 = vsel %vm523, %v331, -1e+30
    %v540 = vsel %vm524, %v336, -1e+30
    %v541 = vsel %vm525, %v341, -1e+30
    %v542 = vcvt.s32.f32 %v478
    %v543 = vcvt.s32.f32 %v479
    %v544 = vcvt.s32.f32 %v480
    %v545 = vcvt.s32.f32 %v481
    %v546 = vcvt.s32.f32 %v482
    %v547 = vcvt.s32.f32 %v483
    %v548 = vcvt.s32.f32 %v484
    %v549 = vcvt.s32.f32 %v485
    %v550 = vcvt.s32.f32 %v486
    %v551 = vcvt.s32.f32 %v487
    %v552 = vcvt.s32.f32 %v488
    %v553 = vcvt.s32.f32 %v489
    %v554 = vcvt.s32.f32 %v490
    %v555 = vcvt.s32.f32 %v491
    %v556 = vcvt.s32.f32 %v492
    %v557 = vcvt.s32.f32 %v493
    %558 = vmax.xlane.f32.xlu0 %v526
    %v559 = vpop.xlane.xlu0 %558
    %560 = vmax.xlane.f32.xlu0 %v527
    %v561 = vpop.xlane.xlu0 %560
    %562 = vmax.xlane.f32.xlu0 %v528
    %v563 = vpop.xlane.xlu0 %562
    %564 = vmax.xlane.f32.xlu0 %v529
    %v565 = vpop.xlane.xlu0 %564
    %566 = vmax.xlane.f32.xlu0 %v530
    %v567 = vpop.xlane.xlu0 %566
    %568 = vmax.xlane.f32.xlu0 %v531
    %v569 = vpop.xlane.xlu0 %568
    %570 = vmax.xlane.f32.xlu0 %v532
    %v571 = vpop.xlane.xlu0 %570
    %572 = vmax.xlane.f32.xlu0 %v533
    %v573 = vpop.xlane.xlu0 %572
    %574 = vmax.xlane.f32.xlu0 %v534
    %v575 = vpop.xlane.xlu0 %574
    %576 = vmax.xlane.f32.xlu0 %v535
    %v577 = vpop.xlane.xlu0 %576
    %578 = vmax.xlane.f32.xlu0 %v536
    %v579 = vpop.xlane.xlu0 %578
    %580 = vmax.xlane.f32.xlu0 %v537
    %v581 = vpop.xlane.xlu0 %580
    %582 = vmax.xlane.f32.xlu0 %v538
    %v583 = vpop.xlane.xlu0 %582
    %584 = vmax.xlane.f32.xlu0 %v539
    %v585 = vpop.xlane.xlu0 %584
    %586 = vmax.xlane.f32.xlu0 %v540
    %v587 = vpop.xlane.xlu0 %586
    %588 = vmax.xlane.f32.xlu0 %v541
    %v589 = vpop.xlane.xlu0 %588
    %v590 = vsub.f32 %v526, %v559
    %v591 = vsub.f32 %v527, %v561
    %v592 = vsub.f32 %v528, %v563
    %v593 = vsub.f32 %v529, %v565
    %v594 = vsub.f32 %v530, %v567
    %v595 = vsub.f32 %v531, %v569
    %v596 = vsub.f32 %v532, %v571
    %v597 = vsub.f32 %v533, %v573
    %v598 = vsub.f32 %v534, %v575
    %v599 = vsub.f32 %v535, %v577
    %v600 = vsub.f32 %v536, %v579
    %v601 = vsub.f32 %v537, %v581
    %v602 = vsub.f32 %v538, %v583
    %v603 = vsub.f32 %v539, %v585
    %v604 = vsub.f32 %v540, %v587
    %v605 = vsub.f32 %v541, %v589
    %v606 = vmul.f32 %v590, 1.442695
    %v607 = vpow.pop %v606
    %v608 = vmul.f32 %v591, 1.442695
    %v609 = vpow.pop %v608
    %v610 = vmul.f32 %v592, 1.442695
    %v611 = vpow.pop %v610
    %v612 = vmul.f32 %v593, 1.442695
    %v613 = vpow.pop %v612
    %v614 = vmul.f32 %v594, 1.442695
    %v615 = vpow.pop %v614
    %v616 = vmul.f32 %v595, 1.442695
    %v617 = vpow.pop %v616
    %v618 = vmul.f32 %v596, 1.442695
    %v619 = vpow.pop %v618
    %v620 = vmul.f32 %v597, 1.442695
    %v621 = vpow.pop %v620
    %v622 = vmul.f32 %v598, 1.442695
    %v623 = vpow.pop %v622
    %v624 = vmul.f32 %v599, 1.442695
    %v625 = vpow.pop %v624
    %v626 = vmul.f32 %v600, 1.442695
    %v627 = vpow.pop %v626
    %v628 = vmul.f32 %v601, 1.442695
    %v629 = vpow.pop %v628
    %v630 = vmul.f32 %v602, 1.442695
    %v631 = vpow.pop %v630
    %v632 = vmul.f32 %v603, 1.442695
    %v633 = vpow.pop %v632
    %v634 = vmul.f32 %v604, 1.442695
    %v635 = vpow.pop %v634
    %v636 = vmul.f32 %v605, 1.442695
    %v637 = vpow.pop %v636
    %638 = vadd.xlane.f32.xlu0 %v607
    %v639 = vpop.xlane.xlu0 %638
    %640 = vadd.xlane.f32.xlu0 %v609
    %v641 = vpop.xlane.xlu0 %640
    %642 = vadd.xlane.f32.xlu0 %v611
    %v643 = vpop.xlane.xlu0 %642
    %644 = vadd.xlane.f32.xlu0 %v613
    %v645 = vpop.xlane.xlu0 %644
    %646 = vadd.xlane.f32.xlu0 %v615
    %v647 = vpop.xlane.xlu0 %646
    %648 = vadd.xlane.f32.xlu0 %v617
    %v649 = vpop.xlane.xlu0 %648
    %650 = vadd.xlane.f32.xlu0 %v619
    %v651 = vpop.xlane.xlu0 %650
    %652 = vadd.xlane.f32.xlu0 %v621
    %v653 = vpop.xlane.xlu0 %652
    %654 = vadd.xlane.f32.xlu0 %v623
    %v655 = vpop.xlane.xlu0 %654
    %656 = vadd.xlane.f32.xlu0 %v625
    %v657 = vpop.xlane.xlu0 %656
    %658 = vadd.xlane.f32.xlu0 %v627
    %v659 = vpop.xlane.xlu0 %658
    %660 = vadd.xlane.f32.xlu0 %v629
    %v661 = vpop.xlane.xlu0 %660
    %662 = vadd.xlane.f32.xlu0 %v631
    %v663 = vpop.xlane.xlu0 %662
    %664 = vadd.xlane.f32.xlu0 %v633
    %v665 = vpop.xlane.xlu0 %664
    %666 = vadd.xlane.f32.xlu0 %v635
    %v667 = vpop.xlane.xlu0 %666
    %668 = vadd.xlane.f32.xlu0 %v637
    %v669 = vpop.xlane.xlu0 %668
    %v670 = vlog2.pop %v639
    %v671 = vmul.f32 %v670, 0.6931472
    %v672 = vlog2.pop %v641
    %v673 = vmul.f32 %v672, 0.6931472
    %v674 = vlog2.pop %v643
    %v675 = vmul.f32 %v674, 0.6931472
    %v676 = vlog2.pop %v645
    %v677 = vmul.f32 %v676, 0.6931472
    %v678 = vlog2.pop %v647
    %v679 = vmul.f32 %v678, 0.6931472
    %v680 = vlog2.pop %v649
    %v681 = vmul.f32 %v680, 0.6931472
    %v682 = vlog2.pop %v651
    %v683 = vmul.f32 %v682, 0.6931472
    %v684 = vlog2.pop %v653
    %v685 = vmul.f32 %v684, 0.6931472
    %v686 = vlog2.pop %v655
    %v687 = vmul.f32 %v686, 0.6931472
    %v688 = vlog2.pop %v657
    %v689 = vmul.f32 %v688, 0.6931472
    %v690 = vlog2.pop %v659
    %v691 = vmul.f32 %v690, 0.6931472
    %v692 = vlog2.pop %v661
    %v693 = vmul.f32 %v692, 0.6931472
    %v694 = vlog2.pop %v663
    %v695 = vmul.f32 %v694, 0.6931472
    %v696 = vlog2.pop %v665
    %v697 = vmul.f32 %v696, 0.6931472
    %v698 = vlog2.pop %v667
    %v699 = vmul.f32 %v698, 0.6931472
    %v700 = vlog2.pop %v669
    %v701 = vmul.f32 %v700, 0.6931472
    %v702 = vadd.f32 %v559, %v671
    %v703 = vadd.f32 %v561, %v673
    %v704 = vadd.f32 %v563, %v675
    %v705 = vadd.f32 %v565, %v677
    %v706 = vadd.f32 %v567, %v679
    %v707 = vadd.f32 %v569, %v681
    %v708 = vadd.f32 %v571, %v683
    %v709 = vadd.f32 %v573, %v685
    %v710 = vadd.f32 %v575, %v687
    %v711 = vadd.f32 %v577, %v689
    %v712 = vadd.f32 %v579, %v691
    %v713 = vadd.f32 %v581, %v693
    %v714 = vadd.f32 %v583, %v695
    %v715 = vadd.f32 %v585, %v697
    %v716 = vadd.f32 %v587, %v699
    %v717 = vadd.f32 %v589, %v701
    %v718 = vld [vmem:[#allocation4] sm:$0x1]
    %v719 = vsub.f32 %v702, %v378
    %v720 = vsub.f32 %v703, %v381
    %v721 = vsub.f32 %v704, %v384
    %v722 = vsub.f32 %v705, %v387
    %v723 = vsub.f32 %v706, %v390
    %v724 = vsub.f32 %v707, %v393
    %v725 = vsub.f32 %v708, %v396
    %v726 = vsub.f32 %v709, %v399
    %v727 = vsub.f32 %v710, %v402
    %v728 = vsub.f32 %v711, %v405
    %v729 = vsub.f32 %v712, %v408
    %v730 = vsub.f32 %v713, %v411
    %v731 = vsub.f32 %v714, %v414
    %v732 = vsub.f32 %v715, %v417
    %v733 = vsub.f32 %v716, %v420
    %v734 = vsub.f32 %v717, %v423
    %v735 = vmul.f32 %v719, %v542
    %v736 = vmul.f32 %v720, %v543
    %v737 = vmul.f32 %v721, %v544
    %v738 = vmul.f32 %v722, %v545
    %v739 = vmul.f32 %v723, %v546
    %v740 = vmul.f32 %v724, %v547
    %v741 = vmul.f32 %v725, %v548
    %v742 = vmul.f32 %v726, %v549
    %v743 = vmul.f32 %v727, %v550
    %v744 = vmul.f32 %v728, %v551
    %v745 = vmul.f32 %v729, %v552
    %v746 = vmul.f32 %v730, %v553
    %v747 = vmul.f32 %v731, %v554
    %v748 = vmul.f32 %v732, %v555
    %v749 = vmul.f32 %v733, %v556
    %v750 = vmul.f32 %v734, %v557
    %vm751 = vcmask 7168
    %v752 = vsel %vm751, %v735, 0.0
    %v753 = vsel %vm751, %v736, 0.0
    %v754 = vadd.f32 %v752, %v753
    %v755 = vsel %vm751, %v737, 0.0
    %v756 = vadd.f32 %v754, %v755
    %v757 = vsel %vm751, %v738, 0.0
    %v758 = vadd.f32 %v756, %v757
    %v759 = vsel %vm751, %v739, 0.0
    %v760 = vadd.f32 %v758, %v759
    %v761 = vsel %vm751, %v740, 0.0
    %v762 = vadd.f32 %v760, %v761
    %v763 = vsel %vm751, %v741, 0.0
    %v764 = vadd.f32 %v762, %v763
    %v765 = vsel %vm751, %v742, 0.0
    %v766 = vadd.f32 %v764, %v765
    %v767 = vsel %vm751, %v743, 0.0
    %v768 = vadd.f32 %v766, %v767
    %v769 = vsel %vm751, %v744, 0.0
    %v770 = vadd.f32 %v768, %v769
    %v771 = vsel %vm751, %v745, 0.0
    %v772 = vadd.f32 %v770, %v771
    %v773 = vsel %vm751, %v746, 0.0
    %v774 = vadd.f32 %v772, %v773
    %v775 = vsel %vm751, %v747, 0.0
    %v776 = vadd.f32 %v774, %v775
    %v777 = vsel %vm751, %v748, 0.0
    %v778 = vadd.f32 %v776, %v777
    %v779 = vsel %vm751, %v749, 0.0
    %v780 = vadd.f32 %v778, %v779
    %v781 = vsel %vm751, %v750, 0.0
    %v782 = vadd.f32 %v780, %v781
    %783 = vadd.xlane.f32.xlu0 %v782
    %v784 = vpop.xlane.xlu0 %783
    %v785 = vrot.slane %v784, 4
    %v786 = vadd.f32 %v784, %v785
    %v787 = vrot.slane %v786, 2
    %v788 = vadd.f32 %v786, %v787
    %v789 = vrot.slane %v788, 1
    %v790 = vadd.f32 %v788, %v789
    %s791 = vtos %v790
    %v792 = vstv %s791
    %v793 = vadd.f32 %v718, %v792
    %vm794 = vcmask 0
    %795 = vst.msk [vmem:[#allocation4] sm:$0x1] %vm794, %v793
    %v796 = vld [vmem:[#allocation5] sm:$0x1]
    %v797 = vmul.f32 %v378, %v542
    %v798 = vmul.f32 %v381, %v543
    %v799 = vmul.f32 %v384, %v544
    %v800 = vmul.f32 %v387, %v545
    %v801 = vmul.f32 %v390, %v546
    %v802 = vmul.f32 %v393, %v547
    %v803 = vmul.f32 %v396, %v548
    %v804 = vmul.f32 %v399, %v549
    %v805 = vmul.f32 %v402, %v550
    %v806 = vmul.f32 %v405, %v551
    %v807 = vmul.f32 %v408, %v552
    %v808 = vmul.f32 %v411, %v553
    %v809 = vmul.f32 %v414, %v554
    %v810 = vmul.f32 %v417, %v555
    %v811 = vmul.f32 %v420, %v556
    %v812 = vmul.f32 %v423, %v557
    %v813 = vsel %vm751, %v797, 0.0
    %v814 = vsel %vm751, %v798, 0.0
    %v815 = vadd.f32 %v813, %v814
    %v816 = vsel %vm751, %v799, 0.0
    %v817 = vadd.f32 %v815, %v816
    %v818 = vsel %vm751, %v800, 0.0
    %v819 = vadd.f32 %v817, %v818
    %v820 = vsel %vm751, %v801, 0.0
    %v821 = vadd.f32 %v819, %v820
    %v822 = vsel %vm751, %v802, 0.0
    %v823 = vadd.f32 %v821, %v822
    %v824 = vsel %vm751, %v803, 0.0
    %v825 = vadd.f32 %v823, %v824
    %v826 = vsel %vm751, %v804, 0.0
    %v827 = vadd.f32 %v825, %v826
    %v828 = vsel %vm751, %v805, 0.0
    %v829 = vadd.f32 %v827, %v828
    %v830 = vsel %vm751, %v806, 0.0
    %v831 = vadd.f32 %v829, %v830
    %v832 = vsel %vm751, %v807, 0.0
    %v833 = vadd.f32 %v831, %v832
    %v834 = vsel %vm751, %v808, 0.0
    %v835 = vadd.f32 %v833, %v834
    %v836 = vsel %vm751, %v809, 0.0
    %v837 = vadd.f32 %v835, %v836
    %v838 = vsel %vm751, %v810, 0.0
    %v839 = vadd.f32 %v837, %v838
    %v840 = vsel %vm751, %v811, 0.0
    %v841 = vadd.f32 %v839, %v840
    %v842 = vsel %vm751, %v812, 0.0
    %v843 = vadd.f32 %v841, %v842
    %844 = vadd.xlane.f32.xlu0 %v843
    %v845 = vpop.xlane.xlu0 %844
    %v846 = vrot.slane %v845, 4
    %v847 = vadd.f32 %v845, %v846
    %v848 = vrot.slane %v847, 2
    %v849 = vadd.f32 %v847, %v848
    %v850 = vrot.slane %v849, 1
    %v851 = vadd.f32 %v849, %v850
    %s852 = vtos %v851
    %v853 = vstv %s852
    %v854 = vadd.f32 %v796, %v853
    %855 = vst.msk [vmem:[#allocation5] sm:$0x1] %vm794, %v854
    %v856 = vmax.f32 %v526, %v530
    %v857 = vmax.f32 %v527, %v531
    %v858 = vmax.f32 %v528, %v532
    %v859 = vmax.f32 %v529, %v533
    %v860 = vmax.f32 %v856, %v534
    %v861 = vmax.f32 %v857, %v535
    %v862 = vmax.f32 %v858, %v536
    %v863 = vmax.f32 %v859, %v537
    %v864 = vmax.f32 %v860, %v538
    %v865 = vmax.f32 %v861, %v539
    %v866 = vmax.f32 %v862, %v540
    %v867 = vmax.f32 %v863, %v541
    %v868 = vmax.f32 %v864, %v865
    %v869 = vmax.f32 %v866, %v867
    %v870 = vmax.f32 %v868, %v869
    %v871 = vrot.slane %v870, 4
    %v872 = vmax.f32 %v870, %v871
    %v873 = vrot.slane %v872, 2
    %v874 = vmax.f32 %v872, %v873
    %v875 = vrot.slane %v874, 1
    %v876 = vmax.f32 %v874, %v875
    %v877 = vld [vmem:[#allocation2] sm:$0x1]
    %v878 = vmax.f32 %v877, %v876
    %v879 = vld [vmem:[#allocation3] sm:$0x1]
    %v880 = vsub.f32 %v877, %v878
    %v881 = vmul.f32 %v880, 1.442695
    %v882 = vpow.pop %v881
    %v883 = vmul.f32 %v879, %v882
    %v885 = vlaneseq
    %v886 = vshrl.u32 %v885, 7
    %v887 = vsub.s32 0, %v886
    %v888 = vrot.slane %v878, %v887
    %v890 = vsub.f32 %v526, %v888
    %v891 = vsub.f32 %v527, %v888
    %v892 = vsub.f32 %v528, %v888
    %v893 = vsub.f32 %v529, %v888
    %v894 = vsub.f32 %v530, %v888
    %v895 = vsub.f32 %v531, %v888
    %v896 = vsub.f32 %v532, %v888
    %v897 = vsub.f32 %v533, %v888
    %v898 = vsub.f32 %v534, %v888
    %v899 = vsub.f32 %v535, %v888
    %v900 = vsub.f32 %v536, %v888
    %v901 = vsub.f32 %v537, %v888
    %v902 = vsub.f32 %v538, %v888
    %v903 = vsub.f32 %v539, %v888
    %v904 = vsub.f32 %v540, %v888
    %v905 = vsub.f32 %v541, %v888
    %v906 = vmul.f32 %v890, 1.442695
    %v907 = vpow.pop %v906
    %v908 = vmul.f32 %v891, 1.442695
    %v909 = vpow.pop %v908
    %v910 = vmul.f32 %v892, 1.442695
    %v911 = vpow.pop %v910
    %v912 = vmul.f32 %v893, 1.442695
    %v913 = vpow.pop %v912
    %v914 = vmul.f32 %v894, 1.442695
    %v915 = vpow.pop %v914
    %v916 = vmul.f32 %v895, 1.442695
    %v917 = vpow.pop %v916
    %v918 = vmul.f32 %v896, 1.442695
    %v919 = vpow.pop %v918
    %v920 = vmul.f32 %v897, 1.442695
    %v921 = vpow.pop %v920
    %v922 = vmul.f32 %v898, 1.442695
    %v923 = vpow.pop %v922
    %v924 = vmul.f32 %v899, 1.442695
    %v925 = vpow.pop %v924
    %v926 = vmul.f32 %v900, 1.442695
    %v927 = vpow.pop %v926
    %v928 = vmul.f32 %v901, 1.442695
    %v929 = vpow.pop %v928
    %v930 = vmul.f32 %v902, 1.442695
    %v931 = vpow.pop %v930
    %v932 = vmul.f32 %v903, 1.442695
    %v933 = vpow.pop %v932
    %v934 = vmul.f32 %v904, 1.442695
    %v935 = vpow.pop %v934
    %v936 = vmul.f32 %v905, 1.442695
    %v937 = vpow.pop %v936
    %v938 = vadd.f32 %v907, %v909
    %v939 = vadd.f32 %v938, %v911
    %v940 = vadd.f32 %v939, %v913
    %v941 = vadd.f32 %v940, %v915
    %v942 = vadd.f32 %v941, %v917
    %v943 = vadd.f32 %v942, %v919
    %v944 = vadd.f32 %v943, %v921
    %v945 = vadd.f32 %v944, %v923
    %v946 = vadd.f32 %v945, %v925
    %v947 = vadd.f32 %v946, %v927
    %v948 = vadd.f32 %v947, %v929
    %v949 = vadd.f32 %v948, %v931
    %v950 = vadd.f32 %v949, %v933
    %v951 = vadd.f32 %v950, %v935
    %v952 = vadd.f32 %v951, %v937
    %v953 = vrot.slane %v952, 4
    %v954 = vadd.f32 %v952, %v953
    %v955 = vrot.slane %v954, 2
    %v956 = vadd.f32 %v954, %v955
    %v957 = vrot.slane %v956, 1
    %v958 = vadd.f32 %v956, %v957
    %v959 = vadd.f32 %v883, %v958
    %960 = vst [vmem:[#allocation3] sm:$0x1] %v959
    %961 = vst [vmem:[#allocation2] sm:$0x1] %v878
    // Predicated region
    $region22: #{tpu_custom_call.1} parent=1 // pred_check
      %p962 = pneg %p24
    $region23: #{tpu_custom_call.1} parent=1 // pred_check_branch
      %964 = sbr.rel (%p962) target = $region25
    $region24: #{tpu_custom_call.1} parent=1 // pred_region
      %v965 = vld [vmem:[#allocation2] sm:$0x1]
      %v966 = vld [vmem:[#allocation3] sm:$0x1]
      %v967 = vlog2.pop %v966
      %v968 = vmul.f32 %v967, 0.6931472
      %v969 = vadd.f32 %v965, %v968
      %v970 = vsel %vm477, %v969, 0.0
      %vm971 = vcmask 1040384
      %v972 = vsel %vm971, %v970, 0.0
      %973 = vadd.xlane.f32.xlu0 %v972
      %v974 = vpop.xlane.xlu0 %973
      %v975 = vrot.slane %v974, 4
      %v976 = vadd.f32 %v974, %v975
      %v977 = vrot.slane %v976, 2
      %v978 = vadd.f32 %v976, %v977
      %v979 = vrot.slane %v978, 1
      %v980 = vadd.f32 %v978, %v979
      %s981 = vtos %v980
      %v982 = vstv %s981
      %s983 = scvt.s32.f32 %s23
      %v984 = vld [vmem:[#allocation4] sm:$0x1]
      %v985 = vstv %s983
      %v986 = vrcp.pop %v985
      %v987 = vmul.f32 %v984, %v986
      %v988 = vld [vmem:[#allocation5] sm:$0x1]
      %v989 = vsub.f32 %v982, %v988
      %v990 = vmul.f32 %v989, %v986
      %v991 = vadd.f32 %v987, %v990
      %v992 = vmul.f32 %v991, 0.5
      %993 = vst.msk [vmem:[#allocation8] sm:$0x1] %vm794, %v992
    $region25: #{tpu_custom_call.1} parent=1 // pred_fallthru
      _
    // Predicated region
    $region26: #{tpu_custom_call.1} parent=1 // pred_check
      _
    $region27: #{tpu_custom_call.1} parent=1 // pred_check_branch
      %995 = sbr.rel (0) target = $region29
    $region28: #{tpu_custom_call.1} parent=1 // pred_region
      %s997 = ssub.s32 16, 16
      %998 = vsyncadd [#allocation9], %s997
      %s1000 = sshll.u32 [#allocation8], 4
      %s1001 = int_to_ptr.vmem [resolvable:$true] %s1000
      %1003 = dma.vmem_to_hbm [thread:$0]  %s1001, 16, %s4, [#allocation9]
    $region29: #{tpu_custom_call.1} parent=1 // pred_fallthru
      _
    // Predicated region
    $region30: #{tpu_custom_call.1} parent=1 // pred_check
      _
    $region31: #{tpu_custom_call.1} parent=1 // pred_check_branch
      %1005 = sbr.rel (0) target = $region33
    $region32: #{tpu_custom_call.1} parent=1 // pred_region
      %s1007 = ssub.s32 2048, 2048
      %1008 = vsyncadd [#allocation11], %s1007
      %s1009 = sshll.u32 [#allocation10], 4
      %s1010 = int_to_ptr.vmem [resolvable:$true] %s1009
      %1015 = dma.vmem_to_hbm [thread:$0]  %s1010, 2048, %s5, [#allocation11], 128, 128, 8
    $region33: #{tpu_custom_call.1} parent=1 // pred_fallthru
      _
    // Predicated region
    $region34: #{tpu_custom_call.1} parent=1 // pred_check
      _
    $region35: #{tpu_custom_call.1} parent=1 // pred_check_branch
      %1017 = sbr.rel (0) target = $region37
    $region36: #{tpu_custom_call.1} parent=1 // pred_region
      %1018 = dma.done [#allocation9], 16
    $region37: #{tpu_custom_call.1} parent=1 // pred_fallthru
      _
    // Predicated region
    $region38: #{tpu_custom_call.1} parent=1 // pred_check
      _
    $region39: #{tpu_custom_call.1} parent=1 // pred_check_branch
      %1020 = sbr.rel (0) target = $region41
    $region40: #{tpu_custom_call.1} parent=1 // pred_region
      %1021 = dma.done [#allocation11], 2048
    $region41: #{tpu_custom_call.1} parent=1 // pred_fallthru
      _
    %1022 = vsyncpa [#allocation9], 1
    %1023 = vsyncpa [#allocation11], 1

</llo_original>
